<compile_context>
chip_gen: v5e
topology: v5e:2x2
jax: 0.10.0
libtpu: 0.0.40
codegen_flags: <defaults>
</compile_context>

<pallas_src>
import functools

import jax
import jax.numpy as jnp
from jax.experimental import pallas as pl
from jax.experimental.pallas import tpu as pltpu

_SELU_ALPHA = 1.6732632423543772
_SELU_SCALE = 1.0507009873554805

# ~2 MiB per block; x2 (in+out) x2 (double-buffer) ~= 8 MiB VMEM working set.
_TARGET_BLOCK_BYTES = 2 * 1024 * 1024


# --------------------------------------------------------------------------
# Kernels
# --------------------------------------------------------------------------
def _act_kernel(x_ref, o_ref, *, relu_type):
    """Elementwise activation on one (block_rows, block_cols) tile."""
    x = x_ref[...]
    if relu_type == "relu":
        y = jnp.maximum(x, jnp.zeros_like(x))
    elif relu_type == "leakyrelu":
        y = jnp.where(x >= 0, x, jnp.asarray(0.2, x.dtype) * x)
    elif relu_type == "selu":
        alpha = jnp.asarray(_SELU_ALPHA, x.dtype)
        scale = jnp.asarray(_SELU_SCALE, x.dtype)
        neg = alpha * (jnp.exp(x) - jnp.asarray(1.0, x.dtype))  # exp -> EUP slot
        y = scale * jnp.where(x >= 0, x, neg)
    else:  # 'none' is short-circuited in the wrapper; kept for completeness
        y = x
    o_ref[...] = y


def _prelu_kernel(x_ref, a_ref, o_ref):
    """PReLU on one (block_rows, block_cols) tile; a_ref is (block_rows, 1)."""
    x = x_ref[...]
    a = a_ref[...]  # (block_rows, 1) -> broadcasts over lanes
    o_ref[...] = jnp.where(x >= 0, x, a * x)


# --------------------------------------------------------------------------
# Layout helpers
# --------------------------------------------------------------------------
def _lane_dense_shape(total):
    """(rows, cols) with cols a large multiple of 128 that exactly factors `total`."""
    for cols in (4096, 2048, 1024, 512, 256, 128):
        if total % cols == 0:
            return total // cols, cols
    return None


def _choose_blocks(rows, cols, itemsize, target_bytes=_TARGET_BLOCK_BYTES):
    """Legal (block_rows, block_cols): each dim is a multiple of (8, 128) or full extent."""
    # Lane (last) dim.
    if cols * 8 * itemsize <= target_bytes:
        bc = cols  # full extent (always legal)
    else:
        bc = max(128, (target_bytes // (8 * itemsize)) // 128 * 128)
        if bc >= cols:
            bc = cols
    # Sublane (second-last) dim fills the remaining budget.
    max_rows = max(8, target_bytes // (bc * itemsize))
    if rows <= max_rows:
        br = rows  # full extent
    else:
        br = max(8, (max_rows // 8) * 8)  # multiple of 8
    return br, bc


# --------------------------------------------------------------------------
# Layer
# --------------------------------------------------------------------------
class ReluLayer:
    """Pallas port of models.blocks.ReluLayer.

    relu_type in {'relu', 'leakyrelu', 'prelu', 'selu', 'none'}.
    PReLU weight initialized to 0.25 per channel (torch.nn.PReLU default).
    """

    def __init__(self, channels, relu_type="relu"):
        self.channels = channels
        self.relu_type = relu_type.lower()
        assert self.relu_type in ("relu", "leakyrelu", "prelu", "selu", "none"), (
            f"Relu type {relu_type} not support."
        )
        if self.relu_type == "prelu":
            # torch.nn.PReLU(channels) default: weight = 0.25 * ones(channels)
            self.prelu_weight = jnp.full((channels,), 0.25, dtype=jnp.float32)
        self._a_cache = {}  # (n, dtype_name) -> (N*C, 1) slope column

    def _prelu_rows(self, n, c, dtype):
        key = (n, jnp.dtype(dtype).name)
        a = self._a_cache.get(key)
        if a is None:
            # Built once per (batch, dtype); prelu_weight is concrete so this
            # never captures a tracer.
            a = jnp.tile(self.prelu_weight.astype(dtype), n).reshape(n * c, 1)
            self._a_cache[key] = a
        return a

    def __call__(self, x):
        # x: (N, C, H, W)
        n, c, h, w = x.shape
        dtype = x.dtype
        itemsize = jnp.dtype(dtype).itemsize
        total = n * c * h * w

        if self.relu_type == "none":
            # Identity pass-through: no HBM round trip at all.
            return x

        cost = pl.CostEstimate(
            flops=total,
            transcendentals=total if self.relu_type == "selu" else 0,
            bytes_accessed=2 * total * itemsize,
        )
        cparams = pltpu.CompilerParams(
            dimension_semantics=("parallel", "parallel"),
        )

        if self.relu_type == "prelu":
            # Keep (N*C, H*W): per-row slope depends only on the channel index.
            rows, cols = n * c, h * w
            x2d = x.reshape(rows, cols)
            a_rows = self._prelu_rows(n, c, dtype)
            br, bc = _choose_blocks(rows, cols, itemsize)
            grid = (pl.cdiv(rows, br), pl.cdiv(cols, bc))
            out2d = pl.pallas_call(
                _prelu_kernel,
                out_shape=jax.ShapeDtypeStruct((rows, cols), dtype),
                grid=grid,
                in_specs=[
                    pl.BlockSpec((br, bc), lambda i, j: (i, j)),
                    pl.BlockSpec((br, 1), lambda i, j: (i, 0)),
                ],
                out_specs=pl.BlockSpec((br, bc), lambda i, j: (i, j)),
                input_output_aliases={0: 0},
                compiler_params=cparams,
                cost_estimate=cost,
            )(x2d, a_rows)
            return out2d.reshape(n, c, h, w)

        # relu / leakyrelu / selu: prefer a lane-dense flattening (cols is a
        # large multiple of 128), falling back to (N*C, H*W) when the element
        # count has no such factorization (avoids any extra padding copy).
        shape2d = _lane_dense_shape(total)
        rows, cols = shape2d if shape2d is not None else (n * c, h * w)
        x2d = x.reshape(rows, cols)
        br, bc = _choose_blocks(rows, cols, itemsize)
        grid = (pl.cdiv(rows, br), pl.cdiv(cols, bc))
        kernel = functools.partial(_act_kernel, relu_type=self.relu_type)
        out2d = pl.pallas_call(
            kernel,
            out_shape=jax.ShapeDtypeStruct((rows, cols), dtype),
            grid=grid,
            in_specs=[pl.BlockSpec((br, bc), lambda i, j: (i, j))],
            out_specs=pl.BlockSpec((br, bc), lambda i, j: (i, j)),
            input_output_aliases={0: 0},
            compiler_params=cparams,
            cost_estimate=cost,
        )(x2d)
        return out2d.reshape(n, c, h, w)

        # TODO(synk): if this layer follows a conv/matmul Pallas kernel in the
        # real model, fuse the activation into that kernel's epilogue instead.


# --------------------------------------------------------------------------
# Reference + self-test
# --------------------------------------------------------------------------
def _reference(x, relu_type, prelu_w=None):
    if relu_type == "relu":
        return jnp.maximum(x, 0.0)
    if relu_type == "leakyrelu":
        return jnp.where(x >= 0, x, 0.2 * x)
    if relu_type == "prelu":
        a = prelu_w.reshape(1, -1, 1, 1)
        return jnp.where(x >= 0, x, a * x)
    if relu_type == "selu":
        return _SELU_SCALE * jnp.where(x >= 0, x, _SELU_ALPHA * (jnp.exp(x) - 1.0))
    return x


if __name__ == "__main__":
    key = jax.random.PRNGKey(0)
    N, C, H, W = 2, 4, 16, 16
    x = jax.random.normal(key, (N, C, H, W), dtype=jnp.float32)

    ok = True
    for relu_type in ("relu", "leakyrelu", "prelu", "selu", "none"):
        layer = ReluLayer(C, relu_type)
        y = layer(x)
        y = jax.block_until_ready(y)
        prelu_w = layer.prelu_weight if relu_type == "prelu" else None
        y_ref = _reference(x, relu_type, prelu_w)
        if not jnp.allclose(y, y_ref, atol=1e-5, rtol=1e-5):
            ok = False
            print(f"MISMATCH for relu_type={relu_type}")

    if ok:
        print("KERNEL_OK")
</pallas_src>

<mosaic_0001>
module attributes {stable_mosaic.version = 11 : i64} {
  func.func @_act_kernel(%arg0: i32, %arg1: i32, %arg2: memref<1x2048xf32, #tpu.memory_space<vmem>>, %arg3: memref<1x2048xf32, #tpu.memory_space<vmem>>) attributes {dimension_semantics = [#tpu.dimension_semantics<parallel>, #tpu.dimension_semantics<parallel>], iteration_bounds = array<i64: 1, 1>, scalar_prefetch = 0 : i64, scratch_operands = 0 : i64, tpu.core_type = #tpu.core_type<tc>, window_params = [{transform_indices = @transform_0, window_bounds = array<i64: 1, 2048>}, {transform_indices = @transform_1, window_bounds = array<i64: 1, 2048>}]} {
    %c0 = arith.constant 0 : index
    %c0_0 = arith.constant 0 : index
    %0 = vector.load %arg2[%c0, %c0_0] : memref<1x2048xf32, #tpu.memory_space<vmem>>, vector<1x2048xf32>
    %cst = arith.constant 0.000000e+00 : f32
    %1 = vector.broadcast %cst : f32 to vector<1x2048xf32>
    %2 = arith.maximumf %0, %1 : vector<1x2048xf32>
    %c0_1 = arith.constant 0 : index
    %c0_2 = arith.constant 0 : index
    %3 = vector.load %arg3[%c0_1, %c0_2] : memref<1x2048xf32, #tpu.memory_space<vmem>>, vector<1x2048xf32>
    tpu.vector_store %arg3[%c0_1, %c0_2], %2 {strides = array<i32>} : memref<1x2048xf32, #tpu.memory_space<vmem>>, vector<1x2048xf32>,
    return
  }
  func.func @transform_0(%arg0: i32, %arg1: i32) -> (i32, i32) {
    %c0_i32 = arith.constant 0 : i32
    return %arg0, %arg1 : i32, i32
  }
  func.func @transform_1(%arg0: i32, %arg1: i32) -> (i32, i32) {
    %c0_i32 = arith.constant 0 : i32
    return %arg0, %arg1 : i32, i32
  }
}

</mosaic_0001>

<llo_original>
// kernel: tpu_custom_call.1
$region0: #{tpu_custom_call.1}
  #allocation0 [shape = 'u32[]', space=smem, size = 0x4, offset = 0x4, fixed_abs, tag = 'smem constant byte address 0x4 - core index']
  #allocation1 [shape = 'u32[72,128]{1,0:T(1,128)}', space=vmem, size = 0x9000, scoped, tag = 'internal scratch']
  %s0 = inlined_call_operand.hbm [shape: f32[1,2048], index: 0, kind: input, shape index: {}, may-alias: {0,1}]
  %s1 = inlined_call_operand.hbm [shape: f32[1,2048], index: 1, kind: output, shape index: {}, may-alias: {0,1}]
  %s2 = sld [smem:[#allocation0]]
  $region18: #{tpu_custom_call.1} parent=0
    _
  %s4 = ssub.s32 1, %s2
  %s5 = scalar_select 0, %s4, %s2
  $region1: #{tpu_custom_call.1} parent=0
    #allocation2 [shape = 'u8[8192]{0}', space=vmem, size = 0x2000, scoped, tag = 'input window, operand 0, single buffered']
    #allocation3 [shape = 's32[1]{0}', space=sflag, size = 0x4, scoped, tag = 'scoped memory for tpu_custom_call.1']
    #allocation4 [shape = 's32[1]{0}', space=sflag, size = 0x4, scoped, tag = 'scoped memory for tpu_custom_call.1']
    #allocation5 [shape = 'u8[8192]{0}', space=vmem, size = 0x2000, scoped, tag = 'output window, operand 0, single buffered']
    %6 = vsyncpa [#allocation3], 0
    %7 = vsyncpa [#allocation4], 0
    // Predicated region
    $region2: #{tpu_custom_call.1} parent=1 // pred_check
      _
    $region3: #{tpu_custom_call.1} parent=1 // pred_check_branch
      %9 = sbr.rel (0) target = $region5
    $region4: #{tpu_custom_call.1} parent=1 // pred_region
      %11 = vsyncadd [#allocation3], 0
      %s13 = sshll.u32 %s0, 4
      %s14 = int_to_ptr.hbm [resolvable:$true] %s13
      %s15 = sshll.u32 [#allocation2], 4
      %s16 = int_to_ptr.vmem [resolvable:$true] %s15
      %18 = dma.hbm_to_vmem [thread:$0]  %s14, 256, %s16, [#allocation3]
    $region5: #{tpu_custom_call.1} parent=1 // pred_fallthru
      _
    // Predicated region
    $region6: #{tpu_custom_call.1} parent=1 // pred_check
      _
    $region7: #{tpu_custom_call.1} parent=1 // pred_check_branch
      %20 = sbr.rel (0) target = $region9
    $region8: #{tpu_custom_call.1} parent=1 // pred_region
      %22 = dma.done [#allocation3], 256
    $region9: #{tpu_custom_call.1} parent=1 // pred_fallthru
      _
    %v23 = vld [vmem:[#allocation2] sm:$0xff]
    %v24 = vld [vmem:[#allocation2 + $0x8] sm:$0xff]
    %v25 = vmax.f32 %v23, 0.0
    %v26 = vmax.f32 %v24, 0.0
    %27 = vst [vmem:[#allocation5] sm:$0xff] %v25
    %28 = vst [vmem:[#allocation5 + $0x8] sm:$0xff] %v26
    // Predicated region
    $region10: #{tpu_custom_call.1} parent=1 // pred_check
      _
    $region11: #{tpu_custom_call.1} parent=1 // pred_check_branch
      %30 = sbr.rel (0) target = $region13
    $region12: #{tpu_custom_call.1} parent=1 // pred_region
      %32 = vsyncadd [#allocation4], 0
      %s34 = sshll.u32 [#allocation5], 4
      %s35 = int_to_ptr.vmem [resolvable:$true] %s34
      %s36 = sshll.u32 %s1, 4
      %s37 = int_to_ptr.hbm [resolvable:$true] %s36
      %39 = dma.vmem_to_hbm [thread:$0]  %s35, 256, %s37, [#allocation4]
    $region13: #{tpu_custom_call.1} parent=1 // pred_fallthru
      _
    // Predicated region
    $region14: #{tpu_custom_call.1} parent=1 // pred_check
      _
    $region15: #{tpu_custom_call.1} parent=1 // pred_check_branch
      %41 = sbr.rel (0) target = $region17
    $region16: #{tpu_custom_call.1} parent=1 // pred_region
      %43 = dma.done [#allocation4], 256
    $region17: #{tpu_custom_call.1} parent=1 // pred_fallthru
      _
    %44 = vsyncpa [#allocation3], 1
    %45 = vsyncpa [#allocation4], 1

</llo_original>
